<compile_context>
chip_gen: v7x
topology: tpu7x:2x2x1
jax: 0.10.0
libtpu: 0.0.40
codegen_flags: <defaults>
</compile_context>

<pallas_src>
import math

import jax
import jax.numpy as jnp
from jax.experimental import pallas as pl
from jax.experimental.pallas import tpu as pltpu


def _copy_kernel(x_ref, o_ref):
    # Dense tile pass-through: whole-vreg loads/stores (no masked vst.msk).
    o_ref[...] = x_ref[...]


def _pick_tile(extent, granule, cap_elems):
    """Largest tile t such that t % granule == 0, extent % t == 0 and
    t <= cap_elems.  Falls back to the full extent, which is always a legal
    BlockSpec dim."""
    if extent <= cap_elems:
        return extent
    if extent % granule != 0:
        return extent
    t = (min(cap_elems, extent) // granule) * granule
    while t > granule and extent % t != 0:
        t -= granule
    return t if (t >= granule and extent % t == 0) else extent


def _pallas_identity_copy(x):
    """Tiled HBM->VMEM->HBM identity copy of x with lane-dense blocks."""
    # Free, contiguous 2-D view: keep the original last dim on the lane axis.
    if x.ndim == 0:
        x2 = x.reshape(1, 1)
    elif x.ndim == 1:
        x2 = x.reshape(1, x.shape[0])
    else:
        N = x.shape[-1]
        M = int(math.prod(x.shape[:-1]))
        x2 = x.reshape(M, N)
    M, N = x2.shape

    dtype_bytes = jnp.dtype(x.dtype).itemsize
    # Cap each block buffer at ~4 MiB: with in+out double-buffering that is
    # <= ~16 MiB of VMEM, safe on every generation including v7x (64 MiB).
    per_buf_cap = 4 * 1024 * 1024

    tn = _pick_tile(N, 128, max(128, per_buf_cap // max(1, 8 * dtype_bytes)))
    row_cap = max(8, per_buf_cap // max(1, tn * dtype_bytes))
    tm = _pick_tile(M, 8, row_cap)

    grid = (M // tm, N // tn)

    return pl.pallas_call(
        _copy_kernel,
        out_shape=jax.ShapeDtypeStruct((M, N), x.dtype),
        grid_spec=pltpu.PrefetchScalarGridSpec(
            num_scalar_prefetch=0,
            grid=grid,
            in_specs=[pl.BlockSpec((tm, tn), lambda i, j: (i, j))],
            out_specs=pl.BlockSpec((tm, tn), lambda i, j: (i, j)),
        ),
        compiler_params=pltpu.CompilerParams(
            dimension_semantics=("parallel", "parallel")),
    )(x2)


def pallas_squeeze(x, dim):
    """Reproduces Squeeze.forward == torch.Tensor.squeeze(dim):
      - if x.shape[dim] == 1 the dim is removed,
      - otherwise the tensor is returned unchanged (PyTorch no-op semantics).
    Supports negative `dim`.  Data movement is a dense Pallas identity copy;
    the dim removal is a free reshape of the output (no transpose, no gather).
    """
    ndim = x.ndim
    if ndim == 0:
        out_shape = x.shape
    else:
        d = dim % ndim  # normalize negative dims
        if x.shape[d] == 1:
            out_shape = x.shape[:d] + x.shape[d + 1:]
        else:
            out_shape = x.shape  # squeeze(dim) with size != 1 is a no-op
    flat = _pallas_identity_copy(x)
    return flat.reshape(out_shape)


if __name__ == "__main__":
    key = jax.random.PRNGKey(0)

    # Case 1: Squeeze(dim=1) on (2, 1, 16, 16) -> (2, 16, 16)
    x1 = jax.random.normal(key, (2, 1, 16, 16), dtype=jnp.float32)
    out1 = pallas_squeeze(x1, dim=1)
    jax.block_until_ready(out1)
    ref1 = jnp.squeeze(x1, axis=1)
    assert out1.shape == (2, 16, 16), out1.shape
    assert jnp.array_equal(out1, ref1)

    # Case 2: negative dim, Squeeze(dim=-2) on (2, 4, 1, 16) -> (2, 4, 16)
    x2 = jax.random.normal(jax.random.PRNGKey(0), (2, 4, 1, 16),
                           dtype=jnp.float32)
    out2 = pallas_squeeze(x2, dim=-2)
    jax.block_until_ready(out2)
    ref2 = jnp.squeeze(x2, axis=-2)
    assert out2.shape == (2, 4, 16), out2.shape
    assert jnp.array_equal(out2, ref2)

    # Case 3: PyTorch no-op semantics — dim whose size != 1 leaves x unchanged.
    x3 = jax.random.normal(key, (2, 4, 16, 16), dtype=jnp.float32)
    out3 = pallas_squeeze(x3, dim=1)
    jax.block_until_ready(out3)
    assert out3.shape == x3.shape, out3.shape
    assert jnp.array_equal(out3, x3)

    print("KERNEL_OK")
</pallas_src>

<mosaic_0001>
module attributes {stable_mosaic.version = 11 : i64} {
  func.func @_copy_kernel(%arg0: i32, %arg1: i32, %arg2: memref<32x16xf32, #tpu.memory_space<vmem>>, %arg3: memref<32x16xf32, #tpu.memory_space<vmem>>) attributes {dimension_semantics = [#tpu.dimension_semantics<parallel>, #tpu.dimension_semantics<parallel>], iteration_bounds = array<i64: 1, 1>, scalar_prefetch = 0 : i64, scratch_operands = 0 : i64, tpu.core_type = #tpu.core_type<tc>, window_params = [{transform_indices = @transform_0, window_bounds = array<i64: 32, 16>}, {transform_indices = @transform_1, window_bounds = array<i64: 32, 16>}]} {
    %c0 = arith.constant 0 : index
    %c0_0 = arith.constant 0 : index
    %0 = vector.load %arg2[%c0, %c0_0] : memref<32x16xf32, #tpu.memory_space<vmem>>, vector<32x16xf32>
    %c0_1 = arith.constant 0 : index
    %c0_2 = arith.constant 0 : index
    %1 = vector.load %arg3[%c0_1, %c0_2] : memref<32x16xf32, #tpu.memory_space<vmem>>, vector<32x16xf32>
    tpu.vector_store %arg3[%c0_1, %c0_2], %0 {strides = array<i32>} : memref<32x16xf32, #tpu.memory_space<vmem>>, vector<32x16xf32>,
    return
  }
  func.func @transform_0(%arg0: i32, %arg1: i32) -> (i32, i32) {
    %c0_i32 = arith.constant 0 : i32
    return %arg0, %arg1 : i32, i32
  }
  func.func @transform_1(%arg0: i32, %arg1: i32) -> (i32, i32) {
    %c0_i32 = arith.constant 0 : i32
    return %arg0, %arg1 : i32, i32
  }
}

</mosaic_0001>

<llo_original>
// kernel: tpu_custom_call.1
$region0: #{tpu_custom_call.1}
  #allocation0 [shape = 'u32[]', space=smem, size = 0x4, offset = 0x4, fixed_abs, tag = 'smem constant byte address 0x4 - core index']
  #allocation1 [shape = 'u32[144,128]{1,0:T(1,128)}', space=vmem, size = 0x12000, scoped, tag = 'internal scratch']
  %s0 = inlined_call_operand.vmem [shape: f32[32,16], index: 0, kind: input, shape index: {}]
  %s1 = inlined_call_operand.vmem [shape: f32[32,16], index: 1, kind: output, shape index: {}]
  %s2 = sld [smem:[#allocation0]]
  $region14: #{tpu_custom_call.1} parent=0
    _
  %s4 = ssub.s32 1, %s2
  %s5 = scalar_select 0, %s4, %s2
  // Predicated region
  $region2: #{tpu_custom_call.1} parent=0 // pred_check
    _
  $region3: #{tpu_custom_call.1} parent=0 // pred_check_branch
    %7 = sbr.rel (0) target = $region5
  $region4: #{tpu_custom_call.1} parent=0 // pred_region
    _
  $region5: #{tpu_custom_call.1} parent=0 // pred_fallthru
    _
  %v8 = vld [vmem:[%s0] sm:$0xff]
  %v9 = vld [vmem:[%s0 + $0x8] sm:$0xff]
  %v10 = vld [vmem:[%s0 + $0x10] sm:$0xff]
  %v11 = vld [vmem:[%s0 + $0x18] sm:$0xff]
  %vm12 = vcmask 130048
  %13 = vst.msk [vmem:[%s1] sm:$0xff] %vm12, %v8
  %14 = vst.msk [vmem:[%s1 + $0x8] sm:$0xff] %vm12, %v9
  %15 = vst.msk [vmem:[%s1 + $0x10] sm:$0xff] %vm12, %v10
  %16 = vst.msk [vmem:[%s1 + $0x18] sm:$0xff] %vm12, %v11
  // Predicated region
  $region6: #{tpu_custom_call.1} parent=0 // pred_check
    _
  $region7: #{tpu_custom_call.1} parent=0 // pred_check_branch
    %18 = sbr.rel (0) target = $region9
  $region8: #{tpu_custom_call.1} parent=0 // pred_region
    _
  $region9: #{tpu_custom_call.1} parent=0 // pred_fallthru
    _
  // Predicated region
  $region10: #{tpu_custom_call.1} parent=0 // pred_check
    _
  $region11: #{tpu_custom_call.1} parent=0 // pred_check_branch
    %20 = sbr.rel (0) target = $region13
  $region12: #{tpu_custom_call.1} parent=0 // pred_region
    _
  $region13: #{tpu_custom_call.1} parent=0 // pred_fallthru
    _

</llo_original>
